<compile_context>
chip_gen: v7x
topology: tpu7x:2x2x1
jax: 0.10.0
libtpu: 0.0.40
codegen_flags: <defaults>
</compile_context>

<pallas_src>
import jax
import jax.numpy as jnp
from jax.experimental import pallas as pl
from jax.experimental.pallas import tpu as pltpu


# ----------------------------------------------------------------------------
# Pallas kernel: fused p_theta forward + output-mask multiply (single step)
# ----------------------------------------------------------------------------
def _p_theta_kernel(x_ref, temb_ref, mask_ref, w1t_ref, w2t_ref, b2_ref,
                    o_ref):
    """Channels-major fused 1x1-conv MLP + mask epilogue.

    Shapes (all resident in VMEM, one grid step):
      x_ref    : (B, C, HW)      NCHW flattened; HW on the lane axis
      temb_ref : (B, hidden, 1)  SiLU(temb MLP) with conv1 bias folded in
      mask_ref : (B, C, HW)
      w1t_ref  : (hidden, C)     conv1 weight, pre-transposed
      w2t_ref  : (C, hidden)     conv2 weight, pre-transposed
      b2_ref   : (C, 1)
      o_ref    : (B, C, HW)
    """
    w1t = w1t_ref[...]
    w2t = w2t_ref[...]
    b2 = b2_ref[...]
    batch = x_ref.shape[0]
    for b in range(batch):                    # static unroll (B is tiny)
        x = x_ref[b]                          # (C, HW)      lane-dense
        temb = temb_ref[b]                    # (hidden, 1)  lane-broadcasts
        # conv1 (1x1) as w1^T @ x^T + (temb + b1)
        h = jnp.dot(w1t, x, preferred_element_type=jnp.float32) + temb
        # SiLU
        h = h * jax.nn.sigmoid(h)             # (hidden, HW) dense vregs
        # conv2 (1x1) as w2^T @ h^T + b2
        out = jnp.dot(w2t, h, preferred_element_type=jnp.float32) + b2
        # adapter step: model_output = output_mask * model_output
        o_ref[b] = (mask_ref[b] * out).astype(o_ref.dtype)


def _p_theta_pallas(x_flat, temb_col, mask_flat, w1t, w2t, b2_col):
    B, C, HW = x_flat.shape
    hidden = w1t.shape[0]
    itemsize = jnp.dtype(x_flat.dtype).itemsize
    flops = 2 * B * 2 * hidden * C * HW                    # two matmuls/batch
    bytes_accessed = itemsize * (3 * B * C * HW + B * hidden
                                 + 2 * hidden * C + C)
    return pl.pallas_call(
        _p_theta_kernel,
        out_shape=jax.ShapeDtypeStruct((B, C, HW), x_flat.dtype),
        grid_spec=pltpu.PrefetchScalarGridSpec(
            num_scalar_prefetch=0,
            grid=(1,),                                     # single step
            in_specs=[
                pl.BlockSpec((B, C, HW), lambda i: (0, 0, 0)),      # x_t
                pl.BlockSpec((B, hidden, 1), lambda i: (0, 0, 0)),  # temb+b1
                pl.BlockSpec((B, C, HW), lambda i: (0, 0, 0)),      # mask
                pl.BlockSpec((hidden, C), lambda i: (0, 0)),        # w1^T
                pl.BlockSpec((C, hidden), lambda i: (0, 0)),        # w2^T
                pl.BlockSpec((C, 1), lambda i: (0, 0)),             # b2
            ],
            out_specs=pl.BlockSpec((B, C, HW), lambda i: (0, 0, 0)),
        ),
        compiler_params=pltpu.CompilerParams(
            dimension_semantics=("arbitrary",)),
        cost_estimate=pl.CostEstimate(
            flops=flops,
            transcendentals=B * hidden * HW,
            bytes_accessed=bytes_accessed),
    )(x_flat, temb_col, mask_flat, w1t, w2t, b2_col)


# ----------------------------------------------------------------------------
# Glue: timestep embedding (tiny, plain JAX) + synthetic inner model wrapper
# ----------------------------------------------------------------------------
def _sinusoidal_embedding(t, dim):
    half = dim // 2
    freqs = jnp.exp(-jnp.log(10000.0) *
                    jnp.arange(half, dtype=jnp.float32) / half)
    args = t.astype(jnp.float32)[:, None] * freqs[None, :]
    return jnp.concatenate([jnp.sin(args), jnp.cos(args)], axis=-1)  # (B, dim)


def _init_params(key, c_in, hidden):
    ks = jax.random.split(key, 4)
    scale1 = 1.0 / jnp.sqrt(c_in)
    scale2 = 1.0 / jnp.sqrt(hidden)
    return dict(
        # weights stored pre-transposed (channels-major compute layout)
        w1t=jax.random.normal(ks[0], (hidden, c_in), jnp.float32) * scale1,
        b1=jnp.zeros((hidden,), jnp.float32),
        w2t=jax.random.normal(ks[1], (c_in, hidden), jnp.float32) * scale2,
        b2=jnp.zeros((c_in,), jnp.float32),
        wt=jax.random.normal(ks[2], (hidden, hidden), jnp.float32) * scale2,
        bt=jnp.zeros((hidden,), jnp.float32),
    )


@jax.jit
def _fused_forward(params, x_t_nchw, timesteps, mask_flat):
    """temb MLP + fused Pallas kernel, all in one jit region."""
    B, C, H, W = x_t_nchw.shape
    hidden = params["w1t"].shape[0]
    # timestep embedding MLP (tiny -> plain JAX glue inside the same jit)
    emb = _sinusoidal_embedding(timesteps, hidden)           # (B, hidden)
    temb = emb @ params["wt"] + params["bt"]
    temb = temb * jax.nn.sigmoid(temb)                       # SiLU
    # fold conv1 bias into temb; column vector broadcasts over HW lanes
    temb_col = (temb + params["b1"])[:, :, None]             # (B, hidden, 1)
    # NCHW is already the kernel layout -> pure reshapes, no transposes
    x_flat = x_t_nchw.reshape(B, C, H * W)
    out_flat = _p_theta_pallas(x_flat, temb_col, mask_flat,
                               params["w1t"], params["w2t"],
                               params["b2"][:, None])
    return out_flat.reshape(B, C, H, W), temb


def _inner_p_theta_model(params, x_t_nchw, timesteps, output_mask_flat):
    """Synthetic `original_p_theta_model` (returns a tuple, like many UNets).

    NOTE: the adapter's `output_mask * model_output` multiply is fused into
    the Pallas kernel (elementwise epilogue), which is semantically identical
    for output index 0.
    """
    out_nchw, temb = _fused_forward(params, x_t_nchw, timesteps,
                                    output_mask_flat)
    return (out_nchw, temb)   # tuple output -> adapter selects index 0


def adapter_p_theta_forward(params, x_t, t, *args,
                            p_theta_model_call_timestep_key="timesteps",
                            p_theta_model_output_index=0,
                            output_mask_key="output_mask",
                            **kwargs):
    """Mirrors AdapterPThetaModel.forward."""
    if p_theta_model_call_timestep_key:
        kwargs[p_theta_model_call_timestep_key] = t
    if output_mask_key:
        output_mask = kwargs.pop(output_mask_key)
    else:
        output_mask = jnp.ones_like(x_t)
    B, C, H, W = x_t.shape
    mask_flat = output_mask.reshape(B, C, H * W)   # pure reshape (NCHW-flat)
    model_output = _inner_p_theta_model(
        params, x_t, kwargs[p_theta_model_call_timestep_key], mask_flat)
    model_output = (model_output[p_theta_model_output_index]
                    if isinstance(model_output, tuple) else model_output)
    return model_output


# ----------------------------------------------------------------------------
# Pure-JAX reference (for verification)
# ----------------------------------------------------------------------------
def _reference(params, x_t, t, output_mask):
    B, C, H, W = x_t.shape
    hidden = params["w1t"].shape[0]
    emb = _sinusoidal_embedding(t, hidden)
    temb = emb @ params["wt"] + params["bt"]
    temb = temb * jax.nn.sigmoid(temb)
    x_flat = jnp.transpose(x_t, (0, 2, 3, 1)).reshape(B, H * W, C)
    h = x_flat @ params["w1t"].T + params["b1"] + temb[:, None, :]
    h = h * jax.nn.sigmoid(h)
    out = h @ params["w2t"].T + params["b2"]
    out = jnp.transpose(out.reshape(B, H, W, C), (0, 3, 1, 2))
    return output_mask * out


if __name__ == "__main__":
    B, C, H, W = 2, 4, 16, 16
    HIDDEN = 32

    key = jax.random.PRNGKey(0)
    k_params, k_x, k_mask = jax.random.split(key, 3)

    params = _init_params(k_params, C, HIDDEN)
    x_t = jax.random.normal(k_x, (B, C, H, W), jnp.float32)
    t = jnp.array([3, 17], dtype=jnp.int32)
    output_mask = (jax.random.uniform(k_mask, (B, C, H, W)) > 0.5
                   ).astype(jnp.float32)

    out = adapter_p_theta_forward(params, x_t, t, output_mask=output_mask)
    out = jax.block_until_ready(out)

    ref = _reference(params, x_t, t, output_mask)
    assert out.shape == (B, C, H, W)
    assert jnp.allclose(out, ref, atol=1e-4, rtol=1e-4)

    print("KERNEL_OK")
</pallas_src>

<mosaic_0001>
module attributes {stable_mosaic.version = 11 : i64} {
  func.func @_p_theta_kernel(%arg0: i32, %arg1: memref<2x4x256xf32, #tpu.memory_space<vmem>>, %arg2: memref<2x32x1xf32, #tpu.memory_space<vmem>>, %arg3: memref<2x4x256xf32, #tpu.memory_space<vmem>>, %arg4: memref<32x4xf32, #tpu.memory_space<vmem>>, %arg5: memref<4x32xf32, #tpu.memory_space<vmem>>, %arg6: memref<4x1xf32, #tpu.memory_space<vmem>>, %arg7: memref<2x4x256xf32, #tpu.memory_space<vmem>>) attributes {dimension_semantics = [#tpu.dimension_semantics<arbitrary>], iteration_bounds = array<i64: 1>, scalar_prefetch = 0 : i64, scratch_operands = 0 : i64, tpu.core_type = #tpu.core_type<tc>, window_params = [{pipeline_mode = #tpu.pipeline_mode<synchronous>, transform_indices = @transform_0, window_bounds = array<i64: 2, 4, 256>}, {pipeline_mode = #tpu.pipeline_mode<synchronous>, transform_indices = @transform_1, window_bounds = array<i64: 2, 32, 1>}, {pipeline_mode = #tpu.pipeline_mode<synchronous>, transform_indices = @transform_2, window_bounds = array<i64: 2, 4, 256>}, {pipeline_mode = #tpu.pipeline_mode<synchronous>, transform_indices = @transform_3, window_bounds = array<i64: 32, 4>}, {pipeline_mode = #tpu.pipeline_mode<synchronous>, transform_indices = @transform_4, window_bounds = array<i64: 4, 32>}, {pipeline_mode = #tpu.pipeline_mode<synchronous>, transform_indices = @transform_5, window_bounds = array<i64: 4, 1>}, {pipeline_mode = #tpu.pipeline_mode<synchronous>, transform_indices = @transform_6, window_bounds = array<i64: 2, 4, 256>}]} {
    %c0 = arith.constant 0 : index
    %c0_0 = arith.constant 0 : index
    %0 = vector.load %arg4[%c0, %c0_0] : memref<32x4xf32, #tpu.memory_space<vmem>>, vector<32x4xf32>
    %c0_1 = arith.constant 0 : index
    %c0_2 = arith.constant 0 : index
    %1 = vector.load %arg5[%c0_1, %c0_2] : memref<4x32xf32, #tpu.memory_space<vmem>>, vector<4x32xf32>
    %c0_3 = arith.constant 0 : index
    %c0_4 = arith.constant 0 : index
    %2 = vector.load %arg6[%c0_3, %c0_4] : memref<4x1xf32, #tpu.memory_space<vmem>>, vector<4x1xf32>
    %c0_5 = arith.constant 0 : index
    %c0_6 = arith.constant 0 : index
    %c0_7 = arith.constant 0 : index
    %3 = vector.load %arg1[%c0_5, %c0_6, %c0_7] : memref<2x4x256xf32, #tpu.memory_space<vmem>>, vector<1x4x256xf32>
    %4 = vector.shape_cast %3 : vector<1x4x256xf32> to vector<4x256xf32>
    %c0_8 = arith.constant 0 : index
    %c0_9 = arith.constant 0 : index
    %c0_10 = arith.constant 0 : index
    %5 = vector.load %arg2[%c0_8, %c0_9, %c0_10] : memref<2x32x1xf32, #tpu.memory_space<vmem>>, vector<1x32x1xf32>
    %6 = vector.shape_cast %5 : vector<1x32x1xf32> to vector<32x1xf32>
    %cst = arith.constant dense<0.000000e+00> : vector<32x256xf32>
    %7 = tpu.matmul %0, %4, %cst {dimension_numbers = #tpu.dot_dimension_numbers<[1], [0], [0], [1], [0, 0, 1, 1], [], []>} : vector<32x4xf32>, vector<4x256xf32>, vector<32x256xf32> -> vector<32x256xf32>
    %8 = vector.broadcast %6 : vector<32x1xf32> to vector<32x256xf32>
    %9 = arith.addf %7, %8 : vector<32x256xf32>
    %10 = arith.negf %9 : vector<32x256xf32>
    %11 = math.exp %10 : vector<32x256xf32>
    %cst_11 = arith.constant 1.000000e+00 : f32
    %12 = vector.broadcast %cst_11 : f32 to vector<32x256xf32>
    %13 = arith.addf %12, %11 : vector<32x256xf32>
    %14 = arith.divf %12, %13 : vector<32x256xf32>
    %15 = arith.mulf %9, %14 : vector<32x256xf32>
    %cst_12 = arith.constant dense<0.000000e+00> : vector<4x256xf32>
    %16 = tpu.matmul %1, %15, %cst_12 {dimension_numbers = #tpu.dot_dimension_numbers<[1], [0], [0], [1], [0, 0, 1, 1], [], []>} : vector<4x32xf32>, vector<32x256xf32>, vector<4x256xf32> -> vector<4x256xf32>
    %17 = vector.broadcast %2 : vector<4x1xf32> to vector<4x256xf32>
    %18 = arith.addf %16, %17 : vector<4x256xf32>
    %c0_13 = arith.constant 0 : index
    %c0_14 = arith.constant 0 : index
    %c0_15 = arith.constant 0 : index
    %19 = vector.load %arg3[%c0_13, %c0_14, %c0_15] : memref<2x4x256xf32, #tpu.memory_space<vmem>>, vector<1x4x256xf32>
    %20 = vector.shape_cast %19 : vector<1x4x256xf32> to vector<4x256xf32>
    %21 = arith.mulf %20, %18 : vector<4x256xf32>
    %c0_16 = arith.constant 0 : index
    %c0_17 = arith.constant 0 : index
    %c0_18 = arith.constant 0 : index
    %22 = vector.load %arg7[%c0_16, %c0_17, %c0_18] : memref<2x4x256xf32, #tpu.memory_space<vmem>>, vector<1x4x256xf32>
    %23 = vector.shape_cast %22 : vector<1x4x256xf32> to vector<4x256xf32>
    %24 = vector.shape_cast %21 : vector<4x256xf32> to vector<1x4x256xf32>
    tpu.vector_store %arg7[%c0_16, %c0_17, %c0_18], %24 {strides = array<i32>} : memref<2x4x256xf32, #tpu.memory_space<vmem>>, vector<1x4x256xf32>,
    %c1 = arith.constant 1 : index
    %c0_19 = arith.constant 0 : index
    %c0_20 = arith.constant 0 : index
    %25 = vector.load %arg1[%c1, %c0_19, %c0_20] : memref<2x4x256xf32, #tpu.memory_space<vmem>>, vector<1x4x256xf32>
    %26 = vector.shape_cast %25 : vector<1x4x256xf32> to vector<4x256xf32>
    %c1_21 = arith.constant 1 : index
    %c0_22 = arith.constant 0 : index
    %c0_23 = arith.constant 0 : index
    %27 = vector.load %arg2[%c1_21, %c0_22, %c0_23] : memref<2x32x1xf32, #tpu.memory_space<vmem>>, vector<1x32x1xf32>
    %28 = vector.shape_cast %27 : vector<1x32x1xf32> to vector<32x1xf32>
    %cst_24 = arith.constant dense<0.000000e+00> : vector<32x256xf32>
    %29 = tpu.matmul %0, %26, %cst_24 {dimension_numbers = #tpu.dot_dimension_numbers<[1], [0], [0], [1], [0, 0, 1, 1], [], []>} : vector<32x4xf32>, vector<4x256xf32>, vector<32x256xf32> -> vector<32x256xf32>
    %30 = vector.broadcast %28 : vector<32x1xf32> to vector<32x256xf32>
    %31 = arith.addf %29, %30 : vector<32x256xf32>
    %32 = arith.negf %31 : vector<32x256xf32>
    %33 = math.exp %32 : vector<32x256xf32>
    %cst_25 = arith.constant 1.000000e+00 : f32
    %34 = vector.broadcast %cst_25 : f32 to vector<32x256xf32>
    %35 = arith.addf %34, %33 : vector<32x256xf32>
    %36 = arith.divf %34, %35 : vector<32x256xf32>
    %37 = arith.mulf %31, %36 : vector<32x256xf32>
    %cst_26 = arith.constant dense<0.000000e+00> : vector<4x256xf32>
    %38 = tpu.matmul %1, %37, %cst_26 {dimension_numbers = #tpu.dot_dimension_numbers<[1], [0], [0], [1], [0, 0, 1, 1], [], []>} : vector<4x32xf32>, vector<32x256xf32>, vector<4x256xf32> -> vector<4x256xf32>
    %39 = vector.broadcast %2 : vector<4x1xf32> to vector<4x256xf32>
    %40 = arith.addf %38, %39 : vector<4x256xf32>
    %c1_27 = arith.constant 1 : index
    %c0_28 = arith.constant 0 : index
    %c0_29 = arith.constant 0 : index
    %41 = vector.load %arg3[%c1_27, %c0_28, %c0_29] : memref<2x4x256xf32, #tpu.memory_space<vmem>>, vector<1x4x256xf32>
    %42 = vector.shape_cast %41 : vector<1x4x256xf32> to vector<4x256xf32>
    %43 = arith.mulf %42, %40 : vector<4x256xf32>
    %c1_30 = arith.constant 1 : index
    %c0_31 = arith.constant 0 : index
    %c0_32 = arith.constant 0 : index
    %44 = vector.load %arg7[%c1_30, %c0_31, %c0_32] : memref<2x4x256xf32, #tpu.memory_space<vmem>>, vector<1x4x256xf32>
    %45 = vector.shape_cast %44 : vector<1x4x256xf32> to vector<4x256xf32>
    %46 = vector.shape_cast %43 : vector<4x256xf32> to vector<1x4x256xf32>
    tpu.vector_store %arg7[%c1_30, %c0_31, %c0_32], %46 {strides = array<i32>} : memref<2x4x256xf32, #tpu.memory_space<vmem>>, vector<1x4x256xf32>,
    return
  }
  func.func @transform_0(%arg0: i32) -> (i32, i32, i32) {
    %c0_i32 = arith.constant 0 : i32
    %c0_i32_0 = arith.constant 0 : i32
    %c0_i32_1 = arith.constant 0 : i32
    %c0_i32_2 = arith.constant 0 : i32
    return %c0_i32, %c0_i32_0, %c0_i32_1 : i32, i32, i32
  }
  func.func @transform_1(%arg0: i32) -> (i32, i32, i32) {
    %c0_i32 = arith.constant 0 : i32
    %c0_i32_0 = arith.constant 0 : i32
    %c0_i32_1 = arith.constant 0 : i32
    %c0_i32_2 = arith.constant 0 : i32
    return %c0_i32, %c0_i32_0, %c0_i32_1 : i32, i32, i32
  }
  func.func @transform_2(%arg0: i32) -> (i32, i32, i32) {
    %c0_i32 = arith.constant 0 : i32
    %c0_i32_0 = arith.constant 0 : i32
    %c0_i32_1 = arith.constant 0 : i32
    %c0_i32_2 = arith.constant 0 : i32
    return %c0_i32, %c0_i32_0, %c0_i32_1 : i32, i32, i32
  }
  func.func @transform_3(%arg0: i32) -> (i32, i32) {
    %c0_i32 = arith.constant 0 : i32
    %c0_i32_0 = arith.constant 0 : i32
    %c0_i32_1 = arith.constant 0 : i32
    return %c0_i32, %c0_i32_0 : i32, i32
  }
  func.func @transform_4(%arg0: i32) -> (i32, i32) {
    %c0_i32 = arith.constant 0 : i32
    %c0_i32_0 = arith.constant 0 : i32
    %c0_i32_1 = arith.constant 0 : i32
    return %c0_i32, %c0_i32_0 : i32, i32
  }
  func.func @transform_5(%arg0: i32) -> (i32, i32) {
    %c0_i32 = arith.constant 0 : i32
    %c0_i32_0 = arith.constant 0 : i32
    %c0_i32_1 = arith.constant 0 : i32
    return %c0_i32, %c0_i32_0 : i32, i32
  }
  func.func @transform_6(%arg0: i32) -> (i32, i32, i32) {
    %c0_i32 = arith.constant 0 : i32
    %c0_i32_0 = arith.constant 0 : i32
    %c0_i32_1 = arith.constant 0 : i32
    %c0_i32_2 = arith.constant 0 : i32
    return %c0_i32, %c0_i32_0, %c0_i32_1 : i32, i32, i32
  }
}

</mosaic_0001>

<llo_original>
// kernel: _fused_forward.1
$region0: #{_fused_forward.1}
  #allocation0 [shape = 'u32[]', space=smem, size = 0x4, offset = 0x4, fixed_abs, tag = 'smem constant byte address 0x4 - core index']
  #allocation1 [shape = 'u32[144,128]{1,0:T(1,128)}', space=vmem, size = 0x12000, scoped, tag = 'internal scratch']
  %s0 = inlined_call_operand.vmem [shape: f32[2,4,256], index: 0, kind: input, shape index: {}]
  %s1 = inlined_call_operand.vmem [shape: f32[2,32,1], index: 1, kind: input, shape index: {}]
  %s2 = inlined_call_operand.vmem [shape: f32[2,4,256], index: 2, kind: input, shape index: {}]
  %s3 = inlined_call_operand.vmem [shape: f32[32,4], index: 3, kind: input, shape index: {}]
  %s4 = inlined_call_operand.vmem [shape: f32[4,32], index: 4, kind: input, shape index: {}]
  %s5 = inlined_call_operand.vmem [shape: f32[4,1], index: 5, kind: input, shape index: {}]
  %s6 = inlined_call_operand.vmem [shape: f32[2,4,256], index: 6, kind: output, shape index: {}]
  %s7 = sld [smem:[#allocation0]]
  $region34: #{_fused_forward.1} parent=0
    _
  %s9 = ssub.s32 1, %s7
  %s10 = scalar_select 0, %s9, %s7
  // Predicated region
  $region2: #{_fused_forward.1} parent=0 // pred_check
    _
  $region3: #{_fused_forward.1} parent=0 // pred_check_branch
    %12 = sbr.rel (0) target = $region5
  $region4: #{_fused_forward.1} parent=0 // pred_region
    _
  $region5: #{_fused_forward.1} parent=0 // pred_fallthru
    _
  // Predicated region
  $region6: #{_fused_forward.1} parent=0 // pred_check
    _
  $region7: #{_fused_forward.1} parent=0 // pred_check_branch
    %14 = sbr.rel (0) target = $region9
  $region8: #{_fused_forward.1} parent=0 // pred_region
    _
  $region9: #{_fused_forward.1} parent=0 // pred_fallthru
    _
  // Predicated region
  $region10: #{_fused_forward.1} parent=0 // pred_check
    _
  $region11: #{_fused_forward.1} parent=0 // pred_check_branch
    %16 = sbr.rel (0) target = $region13
  $region12: #{_fused_forward.1} parent=0 // pred_region
    _
  $region13: #{_fused_forward.1} parent=0 // pred_fallthru
    _
  // Predicated region
  $region14: #{_fused_forward.1} parent=0 // pred_check
    _
  $region15: #{_fused_forward.1} parent=0 // pred_check_branch
    %18 = sbr.rel (0) target = $region17
  $region16: #{_fused_forward.1} parent=0 // pred_region
    _
  $region17: #{_fused_forward.1} parent=0 // pred_fallthru
    _
  // Predicated region
  $region18: #{_fused_forward.1} parent=0 // pred_check
    _
  $region19: #{_fused_forward.1} parent=0 // pred_check_branch
    %20 = sbr.rel (0) target = $region21
  $region20: #{_fused_forward.1} parent=0 // pred_region
    _
  $region21: #{_fused_forward.1} parent=0 // pred_fallthru
    _
  // Predicated region
  $region22: #{_fused_forward.1} parent=0 // pred_check
    _
  $region23: #{_fused_forward.1} parent=0 // pred_check_branch
    %22 = sbr.rel (0) target = $region25
  $region24: #{_fused_forward.1} parent=0 // pred_region
    _
  $region25: #{_fused_forward.1} parent=0 // pred_fallthru
    _
  %v23 = vld [vmem:[%s3] sm:$0xff]
  %v24 = vld [vmem:[%s3 + $0x8] sm:$0xff]
  %v25 = vld [vmem:[%s3 + $0x10] sm:$0xff]
  %v26 = vld [vmem:[%s3 + $0x18] sm:$0xff]
  %v27 = vld [vmem:[%s4] sm:$0xf]
  %v28 = vld [vmem:[%s5] sm:$0xf]
  %v29 = vld [vmem:[%s0] sm:$0xff]
  %v30 = vld [vmem:[%s1] sm:$0xff]
  %v31 = vld [vmem:[%s1 + $0x8] sm:$0xff]
  %v32 = vld [vmem:[%s1 + $0x10] sm:$0xff]
  %v33 = vld [vmem:[%s1 + $0x18] sm:$0xff]
  %35 = vset.pattern.permute.xlu0 0
  %36 = vperm.xlu0 %35, %v30
  %v37 = vpop.permute.xlu0 %36
  %40 = vset.pattern.permute.xlu0 0
  %41 = vperm.xlu0 %40, %v31
  %v42 = vpop.permute.xlu0 %41
  %45 = vset.pattern.permute.xlu0 0
  %46 = vperm.xlu0 %45, %v32
  %v47 = vpop.permute.xlu0 %46
  %50 = vset.pattern.permute.xlu0 0
  %51 = vperm.xlu0 %50, %v33
  %v52 = vpop.permute.xlu0 %51
  %v55 = vcombine.high %v29, %v29
  %vm56 = vcmask 31744
  %v58 = vsel %vm56, %v23, 0
  %v61 = vsel %vm56, %v24, 0
  %v64 = vsel %vm56, %v25, 0
  %v67 = vsel %vm56, %v26, 0
  %vm69 = vcmask 1043456
  %v70 = vsel %vm69, %v29, 0
  %v72 = vsel %vm69, %v55, 0
  %74 = vmatprep.subr.mxu0 %v72
  %75 = vmatpush1.msra.mxu0 %v70
  %76 = vmatprep.subr.mxu0 0.0
  %77 = vmatpush1.msra.mxu0 0.0
  %78 = vmatprep.subr.mxu0 0.0
  %79 = vmatpush1.msra.mxu0 0.0
  %80 = vmatprep.subr.mxu0 0.0
  %81 = vmatpush1.msra.mxu0 0.0
  %82 = vmatprep.subr.mxu0 0.0
  %83 = vmatpush1.msra.mxu0 0.0
  %84 = vmatprep.subr.mxu0 0.0
  %85 = vmatpush1.msra.mxu0 0.0
  %86 = vmatprep.subr.mxu0 0.0
  %87 = vmatpush1.msra.mxu0 0.0
  %88 = vmatprep.subr.mxu0 0.0
  %89 = vmatpush1.msra.mxu0 0.0
  %90 = vmatprep.subr.mxu0 0.0
  %91 = vmatpush1.msra.mxu0 0.0
  %92 = vmatprep.subr.mxu0 0.0
  %93 = vmatpush1.msra.mxu0 0.0
  %94 = vmatprep.subr.mxu0 0.0
  %95 = vmatpush1.msra.mxu0 0.0
  %96 = vmatprep.subr.mxu0 0.0
  %97 = vmatpush1.msra.mxu0 0.0
  %98 = vmatprep.subr.mxu0 0.0
  %99 = vmatpush1.msra.mxu0 0.0
  %100 = vmatprep.subr.mxu0 0.0
  %101 = vmatpush1.msra.mxu0 0.0
  %102 = vmatprep.subr.mxu0 0.0
  %103 = vmatpush1.msra.mxu0 0.0
  %104 = vmatprep.subr.mxu0 0.0
  %105 = vmatpush1.msra.mxu0 0.0
  %106 = vmatprep.subr.mxu0 0.0
  %107 = vmatpush1.msra.mxu0 0.0
  %108 = vmatprep.subr.mxu0 0.0
  %109 = vmatpush1.msra.mxu0 0.0
  %110 = vmatprep.subr.mxu0 0.0
  %111 = vmatpush1.msra.mxu0 0.0
  %112 = vmatprep.subr.mxu0 0.0
  %113 = vmatpush1.msra.mxu0 0.0
  %114 = vmatprep.subr.mxu0 0.0
  %115 = vmatpush1.msra.mxu0 0.0
  %116 = vmatprep.subr.mxu0 0.0
  %117 = vmatpush1.msra.mxu0 0.0
  %118 = vmatprep.subr.mxu0 0.0
  %119 = vmatpush1.msra.mxu0 0.0
  %120 = vmatprep.subr.mxu0 0.0
  %121 = vmatpush1.msra.mxu0 0.0
  %122 = vmatprep.subr.mxu0 0.0
  %123 = vmatpush1.msra.mxu0 0.0
  %124 = vmatprep.subr.mxu0 0.0
  %125 = vmatpush1.msra.mxu0 0.0
  %126 = vmatprep.subr.mxu0 0.0
  %127 = vmatpush1.msra.mxu0 0.0
  %128 = vmatprep.subr.mxu0 0.0
  %129 = vmatpush1.msra.mxu0 0.0
  %130 = vmatprep.subr.mxu0 0.0
  %131 = vmatpush1.msra.mxu0 0.0
  %132 = vmatprep.subr.mxu0 0.0
  %133 = vmatpush1.msra.mxu0 0.0
  %134 = vmatprep.subr.mxu0 0.0
  %135 = vmatpush1.msra.mxu0 0.0
  %136 = vmatprep.subr.mxu0 0.0
  %137 = vmatpush1.msra.mxu0 0.0
  %138 = vmatprep.mubr.f32.mxu0 0.0
  %139 = vmatmul.mubr.f32.gmra.mrb[0].mxu0 %v58
  %v140 = vpop.f32.mrb[0].mxu0
  %v141 = vadd.f32 %v37, %v140
  %v142 = vpop.f32.mrb[0].mxu0
  %v143 = vadd.f32 %v37, %v142
  %144 = vmatprep.mubr.f32.mxu0 0.0
  %145 = vmatmul.mubr.f32.gmra.mrb[0].mxu0 %v61
  %v146 = vpop.f32.mrb[0].mxu0
  %v147 = vadd.f32 %v42, %v146
  %v148 = vpop.f32.mrb[0].mxu0
  %v149 = vadd.f32 %v42, %v148
  %150 = vmatprep.mubr.f32.mxu0 0.0
  %151 = vmatmul.mubr.f32.gmra.mrb[0].mxu0 %v64
  %v152 = vpop.f32.mrb[0].mxu0
  %v153 = vadd.f32 %v47, %v152
  %v154 = vpop.f32.mrb[0].mxu0
  %v155 = vadd.f32 %v47, %v154
  %156 = vmatprep.mubr.f32.mxu0 0.0
  %157 = vmatmul.mubr.f32.gmra.mrb[0].mxu0 %v67
  %v158 = vpop.f32.mrb[0].mxu0
  %v159 = vadd.f32 %v52, %v158
  %v160 = vpop.f32.mrb[0].mxu0
  %v161 = vadd.f32 %v52, %v160
  %162 = vdwg.mxu0
  %v163 = vxor.u32 %v141, 2147483648
  %v164 = vxor.u32 %v143, 2147483648
  %v165 = vxor.u32 %v147, 2147483648
  %v166 = vxor.u32 %v149, 2147483648
  %v167 = vxor.u32 %v153, 2147483648
  %v168 = vxor.u32 %v155, 2147483648
  %v169 = vxor.u32 %v159, 2147483648
  %v170 = vxor.u32 %v161, 2147483648
  %v171 = vmul.f32 %v163, 1.442695
  %v172 = vpow.pop %v171
  %v173 = vmul.f32 %v164, 1.442695
  %v174 = vpow.pop %v173
  %v175 = vmul.f32 %v165, 1.442695
  %v176 = vpow.pop %v175
  %v177 = vmul.f32 %v166, 1.442695
  %v178 = vpow.pop %v177
  %v179 = vmul.f32 %v167, 1.442695
  %v180 = vpow.pop %v179
  %v181 = vmul.f32 %v168, 1.442695
  %v182 = vpow.pop %v181
  %v183 = vmul.f32 %v169, 1.442695
  %v184 = vpow.pop %v183
  %v185 = vmul.f32 %v170, 1.442695
  %v186 = vpow.pop %v185
  %v187 = vadd.f32 %v172, 1.0
  %v188 = vadd.f32 %v174, 1.0
  %v189 = vadd.f32 %v176, 1.0
  %v190 = vadd.f32 %v178, 1.0
  %v191 = vadd.f32 %v180, 1.0
  %v192 = vadd.f32 %v182, 1.0
  %v193 = vadd.f32 %v184, 1.0
  %v194 = vadd.f32 %v186, 1.0
  %v195 = vrcp.pop %v187
  %v196 = vmul.f32 1.0, %v195
  %v197 = vrcp.pop %v188
  %v198 = vmul.f32 1.0, %v197
  %v199 = vrcp.pop %v189
  %v200 = vmul.f32 1.0, %v199
  %v201 = vrcp.pop %v190
  %v202 = vmul.f32 1.0, %v201
  %v203 = vrcp.pop %v191
  %v204 = vmul.f32 1.0, %v203
  %v205 = vrcp.pop %v192
  %v206 = vmul.f32 1.0, %v205
  %v207 = vrcp.pop %v193
  %v208 = vmul.f32 1.0, %v207
  %v209 = vrcp.pop %v194
  %v210 = vmul.f32 1.0, %v209
  %v211 = vmul.f32 %v141, %v196
  %v212 = vmul.f32 %v143, %v198
  %v213 = vmul.f32 %v147, %v200
  %v214 = vmul.f32 %v149, %v202
  %v215 = vmul.f32 %v153, %v204
  %v216 = vmul.f32 %v155, %v206
  %v217 = vmul.f32 %v159, %v208
  %v218 = vmul.f32 %v161, %v210
  %220 = vset.pattern.permute.xlu0 0
  %221 = vperm.xlu0 %220, %v28
  %v222 = vpop.permute.xlu0 %221
  %vm224 = vcmask 261120
  %v226 = vsel %vm224, %v27, 0
  %228 = vmatprep.subr.mxu0 %v212
  %229 = vmatpush1.msra.mxu0 %v211
  %230 = vmatprep.subr.mxu0 %v214
  %231 = vmatpush1.msra.mxu0 %v213
  %232 = vmatprep.subr.mxu0 %v216
  %233 = vmatpush1.msra.mxu0 %v215
  %234 = vmatprep.subr.mxu0 %v218
  %235 = vmatpush1.msra.mxu0 %v217
  %236 = vmatprep.subr.mxu0 0.0
  %237 = vmatpush1.msra.mxu0 0.0
  %238 = vmatprep.subr.mxu0 0.0
  %239 = vmatpush1.msra.mxu0 0.0
  %240 = vmatprep.subr.mxu0 0.0
  %241 = vmatpush1.msra.mxu0 0.0
  %242 = vmatprep.subr.mxu0 0.0
  %243 = vmatpush1.msra.mxu0 0.0
  %244 = vmatprep.subr.mxu0 0.0
  %245 = vmatpush1.msra.mxu0 0.0
  %246 = vmatprep.subr.mxu0 0.0
  %247 = vmatpush1.msra.mxu0 0.0
  %248 = vmatprep.subr.mxu0 0.0
  %249 = vmatpush1.msra.mxu0 0.0
  %250 = vmatprep.subr.mxu0 0.0
  %251 = vmatpush1.msra.mxu0 0.0
  %252 = vmatprep.subr.mxu0 0.0
  %253 = vmatpush1.msra.mxu0 0.0
  %254 = vmatprep.subr.mxu0 0.0
  %255 = vmatpush1.msra.mxu0 0.0
  %256 = vmatprep.subr.mxu0 0.0
  %257 = vmatpush1.msra.mxu0 0.0
  %258 = vmatprep.subr.mxu0 0.0
  %259 = vmatpush1.msra.mxu0 0.0
  %260 = vmatprep.subr.mxu0 0.0
  %261 = vmatpush1.msra.mxu0 0.0
  %262 = vmatprep.subr.mxu0 0.0
  %263 = vmatpush1.msra.mxu0 0.0
  %264 = vmatprep.subr.mxu0 0.0
  %265 = vmatpush1.msra.mxu0 0.0
  %266 = vmatprep.subr.mxu0 0.0
  %267 = vmatpush1.msra.mxu0 0.0
  %268 = vmatprep.subr.mxu0 0.0
  %269 = vmatpush1.msra.mxu0 0.0
  %270 = vmatprep.subr.mxu0 0.0
  %271 = vmatpush1.msra.mxu0 0.0
  %272 = vmatprep.subr.mxu0 0.0
  %273 = vmatpush1.msra.mxu0 0.0
  %274 = vmatprep.subr.mxu0 0.0
  %275 = vmatpush1.msra.mxu0 0.0
  %276 = vmatprep.subr.mxu0 0.0
  %277 = vmatpush1.msra.mxu0 0.0
  %278 = vmatprep.subr.mxu0 0.0
  %279 = vmatpush1.msra.mxu0 0.0
  %280 = vmatprep.subr.mxu0 0.0
  %281 = vmatpush1.msra.mxu0 0.0
  %282 = vmatprep.subr.mxu0 0.0
  %283 = vmatpush1.msra.mxu0 0.0
  %284 = vmatprep.subr.mxu0 0.0
  %285 = vmatpush1.msra.mxu0 0.0
  %286 = vmatprep.subr.mxu0 0.0
  %287 = vmatpush1.msra.mxu0 0.0
  %288 = vmatprep.subr.mxu0 0.0
  %289 = vmatpush1.msra.mxu0 0.0
  %290 = vmatprep.subr.mxu0 0.0
  %291 = vmatpush1.msra.mxu0 0.0
  %292 = vmatprep.mubr.f32.mxu0 0.0
  %293 = vmatmul.mubr.f32.gmra.mrb[0].mxu0 %v226
  %v294 = vpop.f32.mrb[0].mxu0
  %v295 = vadd.f32 %v222, %v294
  %v296 = vpop.f32.mrb[0].mxu0
  %v297 = vadd.f32 %v222, %v296
  %298 = vdwg.mxu0
  %v299 = vld [vmem:[%s2] sm:$0xff]
  %v302 = vcombine.low %v295, %v297
  %v304 = vmul.f32 %v299, %v302
  %305 = vst [vmem:[%s6] sm:$0xff] %v304
  %s306 = scalar_lea.vmem %s0, 8
  %v307 = vld [vmem:[%s306] sm:$0xff]
  %s308 = scalar_lea.vmem %s1, 32
  %v309 = vld [vmem:[%s308] sm:$0xff]
  %v310 = vld [vmem:[%s308 + $0x8] sm:$0xff]
  %v311 = vld [vmem:[%s308 + $0x10] sm:$0xff]
  %v312 = vld [vmem:[%s308 + $0x18] sm:$0xff]
  %314 = vset.pattern.permute.xlu0 0
  %315 = vperm.xlu0 %314, %v309
  %v316 = vpop.permute.xlu0 %315
  %319 = vset.pattern.permute.xlu0 0
  %320 = vperm.xlu0 %319, %v310
  %v321 = vpop.permute.xlu0 %320
  %324 = vset.pattern.permute.xlu0 0
  %325 = vperm.xlu0 %324, %v311
  %v326 = vpop.permute.xlu0 %325
  %329 = vset.pattern.permute.xlu0 0
  %330 = vperm.xlu0 %329, %v312
  %v331 = vpop.permute.xlu0 %330
  %v334 = vcombine.high %v307, %v307
  %v335 = vsel %vm69, %v307, 0
  %v337 = vsel %vm69, %v334, 0
  %339 = vmatprep.subr.mxu0 %v337
  %340 = vmatpush1.msra.mxu0 %v335
  %341 = vmatprep.subr.mxu0 0.0
  %342 = vmatpush1.msra.mxu0 0.0
  %343 = vmatprep.subr.mxu0 0.0
  %344 = vmatpush1.msra.mxu0 0.0
  %345 = vmatprep.subr.mxu0 0.0
  %346 = vmatpush1.msra.mxu0 0.0
  %347 = vmatprep.subr.mxu0 0.0
  %348 = vmatpush1.msra.mxu0 0.0
  %349 = vmatprep.subr.mxu0 0.0
  %350 = vmatpush1.msra.mxu0 0.0
  %351 = vmatprep.subr.mxu0 0.0
  %352 = vmatpush1.msra.mxu0 0.0
  %353 = vmatprep.subr.mxu0 0.0
  %354 = vmatpush1.msra.mxu0 0.0
  %355 = vmatprep.subr.mxu0 0.0
  %356 = vmatpush1.msra.mxu0 0.0
  %357 = vmatprep.subr.mxu0 0.0
  %358 = vmatpush1.msra.mxu0 0.0
  %359 = vmatprep.subr.mxu0 0.0
  %360 = vmatpush1.msra.mxu0 0.0
  %361 = vmatprep.subr.mxu0 0.0
  %362 = vmatpush1.msra.mxu0 0.0
  %363 = vmatprep.subr.mxu0 0.0
  %364 = vmatpush1.msra.mxu0 0.0
  %365 = vmatprep.subr.mxu0 0.0
  %366 = vmatpush1.msra.mxu0 0.0
  %367 = vmatprep.subr.mxu0 0.0
  %368 = vmatpush1.msra.mxu0 0.0
  %369 = vmatprep.subr.mxu0 0.0
  %370 = vmatpush1.msra.mxu0 0.0
  %371 = vmatprep.subr.mxu0 0.0
  %372 = vmatpush1.msra.mxu0 0.0
  %373 = vmatprep.subr.mxu0 0.0
  %374 = vmatpush1.msra.mxu0 0.0
  %375 = vmatprep.subr.mxu0 0.0
  %376 = vmatpush1.msra.mxu0 0.0
  %377 = vmatprep.subr.mxu0 0.0
  %378 = vmatpush1.msra.mxu0 0.0
  %379 = vmatprep.subr.mxu0 0.0
  %380 = vmatpush1.msra.mxu0 0.0
  %381 = vmatprep.subr.mxu0 0.0
  %382 = vmatpush1.msra.mxu0 0.0
  %383 = vmatprep.subr.mxu0 0.0
  %384 = vmatpush1.msra.mxu0 0.0
  %385 = vmatprep.subr.mxu0 0.0
  %386 = vmatpush1.msra.mxu0 0.0
  %387 = vmatprep.subr.mxu0 0.0
  %388 = vmatpush1.msra.mxu0 0.0
  %389 = vmatprep.subr.mxu0 0.0
  %390 = vmatpush1.msra.mxu0 0.0
  %391 = vmatprep.subr.mxu0 0.0
  %392 = vmatpush1.msra.mxu0 0.0
  %393 = vmatprep.subr.mxu0 0.0
  %394 = vmatpush1.msra.mxu0 0.0
  %395 = vmatprep.subr.mxu0 0.0
  %396 = vmatpush1.msra.mxu0 0.0
  %397 = vmatprep.subr.mxu0 0.0
  %398 = vmatpush1.msra.mxu0 0.0
  %399 = vmatprep.subr.mxu0 0.0
  %400 = vmatpush1.msra.mxu0 0.0
  %401 = vmatprep.subr.mxu0 0.0
  %402 = vmatpush1.msra.mxu0 0.0
  %403 = vmatprep.mubr.f32.mxu0 0.0
  %404 = vmatmul.mubr.f32.gmra.mrb[0].mxu0 %v58
  %v405 = vpop.f32.mrb[0].mxu0
  %v406 = vadd.f32 %v316, %v405
  %v407 = vpop.f32.mrb[0].mxu0
  %v408 = vadd.f32 %v316, %v407
  %409 = vmatprep.mubr.f32.mxu0 0.0
  %410 = vmatmul.mubr.f32.gmra.mrb[0].mxu0 %v61
  %v411 = vpop.f32.mrb[0].mxu0
  %v412 = vadd.f32 %v321, %v411
  %v413 = vpop.f32.mrb[0].mxu0
  %v414 = vadd.f32 %v321, %v413
  %415 = vmatprep.mubr.f32.mxu0 0.0
  %416 = vmatmul.mubr.f32.gmra.mrb[0].mxu0 %v64
  %v417 = vpop.f32.mrb[0].mxu0
  %v418 = vadd.f32 %v326, %v417
  %v419 = vpop.f32.mrb[0].mxu0
  %v420 = vadd.f32 %v326, %v419
  %421 = vmatprep.mubr.f32.mxu0 0.0
  %422 = vmatmul.mubr.f32.gmra.mrb[0].mxu0 %v67
  %v423 = vpop.f32.mrb[0].mxu0
  %v424 = vadd.f32 %v331, %v423
  %v425 = vpop.f32.mrb[0].mxu0
  %v426 = vadd.f32 %v331, %v425
  %427 = vdwg.mxu0
  %v428 = vxor.u32 %v406, 2147483648
  %v429 = vxor.u32 %v408, 2147483648
  %v430 = vxor.u32 %v412, 2147483648
  %v431 = vxor.u32 %v414, 2147483648
  %v432 = vxor.u32 %v418, 2147483648
  %v433 = vxor.u32 %v420, 2147483648
  %v434 = vxor.u32 %v424, 2147483648
  %v435 = vxor.u32 %v426, 2147483648
  %v436 = vmul.f32 %v428, 1.442695
  %v437 = vpow.pop %v436
  %v438 = vmul.f32 %v429, 1.442695
  %v439 = vpow.pop %v438
  %v440 = vmul.f32 %v430, 1.442695
  %v441 = vpow.pop %v440
  %v442 = vmul.f32 %v431, 1.442695
  %v443 = vpow.pop %v442
  %v444 = vmul.f32 %v432, 1.442695
  %v445 = vpow.pop %v444
  %v446 = vmul.f32 %v433, 1.442695
  %v447 = vpow.pop %v446
  %v448 = vmul.f32 %v434, 1.442695
  %v449 = vpow.pop %v448
  %v450 = vmul.f32 %v435, 1.442695
  %v451 = vpow.pop %v450
  %v452 = vadd.f32 %v437, 1.0
  %v453 = vadd.f32 %v439, 1.0
  %v454 = vadd.f32 %v441, 1.0
  %v455 = vadd.f32 %v443, 1.0
  %v456 = vadd.f32 %v445, 1.0
  %v457 = vadd.f32 %v447, 1.0
  %v458 = vadd.f32 %v449, 1.0
  %v459 = vadd.f32 %v451, 1.0
  %v460 = vrcp.pop %v452
  %v461 = vmul.f32 1.0, %v460
  %v462 = vrcp.pop %v453
  %v463 = vmul.f32 1.0, %v462
  %v464 = vrcp.pop %v454
  %v465 = vmul.f32 1.0, %v464
  %v466 = vrcp.pop %v455
  %v467 = vmul.f32 1.0, %v466
  %v468 = vrcp.pop %v456
  %v469 = vmul.f32 1.0, %v468
  %v470 = vrcp.pop %v457
  %v471 = vmul.f32 1.0, %v470
  %v472 = vrcp.pop %v458
  %v473 = vmul.f32 1.0, %v472
  %v474 = vrcp.pop %v459
  %v475 = vmul.f32 1.0, %v474
  %v476 = vmul.f32 %v406, %v461
  %v477 = vmul.f32 %v408, %v463
  %v478 = vmul.f32 %v412, %v465
  %v479 = vmul.f32 %v414, %v467
  %v480 = vmul.f32 %v418, %v469
  %v481 = vmul.f32 %v420, %v471
  %v482 = vmul.f32 %v424, %v473
  %v483 = vmul.f32 %v426, %v475
  %484 = vmatprep.subr.mxu0 %v477
  %485 = vmatpush1.msra.mxu0 %v476
  %486 = vmatprep.subr.mxu0 %v479
  %487 = vmatpush1.msra.mxu0 %v478
  %488 = vmatprep.subr.mxu0 %v481
  %489 = vmatpush1.msra.mxu0 %v480
  %490 = vmatprep.subr.mxu0 %v483
  %491 = vmatpush1.msra.mxu0 %v482
  %492 = vmatprep.subr.mxu0 0.0
  %493 = vmatpush1.msra.mxu0 0.0
  %494 = vmatprep.subr.mxu0 0.0
  %495 = vmatpush1.msra.mxu0 0.0
  %496 = vmatprep.subr.mxu0 0.0
  %497 = vmatpush1.msra.mxu0 0.0
  %498 = vmatprep.subr.mxu0 0.0
  %499 = vmatpush1.msra.mxu0 0.0
  %500 = vmatprep.subr.mxu0 0.0
  %501 = vmatpush1.msra.mxu0 0.0
  %502 = vmatprep.subr.mxu0 0.0
  %503 = vmatpush1.msra.mxu0 0.0
  %504 = vmatprep.subr.mxu0 0.0
  %505 = vmatpush1.msra.mxu0 0.0
  %506 = vmatprep.subr.mxu0 0.0
  %507 = vmatpush1.msra.mxu0 0.0
  %508 = vmatprep.subr.mxu0 0.0
  %509 = vmatpush1.msra.mxu0 0.0
  %510 = vmatprep.subr.mxu0 0.0
  %511 = vmatpush1.msra.mxu0 0.0
  %512 = vmatprep.subr.mxu0 0.0
  %513 = vmatpush1.msra.mxu0 0.0
  %514 = vmatprep.subr.mxu0 0.0
  %515 = vmatpush1.msra.mxu0 0.0
  %516 = vmatprep.subr.mxu0 0.0
  %517 = vmatpush1.msra.mxu0 0.0
  %518 = vmatprep.subr.mxu0 0.0
  %519 = vmatpush1.msra.mxu0 0.0
  %520 = vmatprep.subr.mxu0 0.0
  %521 = vmatpush1.msra.mxu0 0.0
  %522 = vmatprep.subr.mxu0 0.0
  %523 = vmatpush1.msra.mxu0 0.0
  %524 = vmatprep.subr.mxu0 0.0
  %525 = vmatpush1.msra.mxu0 0.0
  %526 = vmatprep.subr.mxu0 0.0
  %527 = vmatpush1.msra.mxu0 0.0
  %528 = vmatprep.subr.mxu0 0.0
  %529 = vmatpush1.msra.mxu0 0.0
  %530 = vmatprep.subr.mxu0 0.0
  %531 = vmatpush1.msra.mxu0 0.0
  %532 = vmatprep.subr.mxu0 0.0
  %533 = vmatpush1.msra.mxu0 0.0
  %534 = vmatprep.subr.mxu0 0.0
  %535 = vmatpush1.msra.mxu0 0.0
  %536 = vmatprep.subr.mxu0 0.0
  %537 = vmatpush1.msra.mxu0 0.0
  %538 = vmatprep.subr.mxu0 0.0
  %539 = vmatpush1.msra.mxu0 0.0
  %540 = vmatprep.subr.mxu0 0.0
  %541 = vmatpush1.msra.mxu0 0.0
  %542 = vmatprep.subr.mxu0 0.0
  %543 = vmatpush1.msra.mxu0 0.0
  %544 = vmatprep.subr.mxu0 0.0
  %545 = vmatpush1.msra.mxu0 0.0
  %546 = vmatprep.subr.mxu0 0.0
  %547 = vmatpush1.msra.mxu0 0.0
  %548 = vmatprep.mubr.f32.mxu0 0.0
  %549 = vmatmul.mubr.f32.gmra.mrb[0].mxu0 %v226
  %v550 = vpop.f32.mrb[0].mxu0
  %v551 = vadd.f32 %v222, %v550
  %v552 = vpop.f32.mrb[0].mxu0
  %v553 = vadd.f32 %v222, %v552
  %554 = vdwg.mxu0
  %s555 = scalar_lea.vmem %s2, 8
  %v556 = vld [vmem:[%s555] sm:$0xff]
  %v559 = vcombine.low %v551, %v553
  %v561 = vmul.f32 %v556, %v559
  %s562 = scalar_lea.vmem %s6, 8
  %563 = vst [vmem:[%s562] sm:$0xff] %v561
  // Predicated region
  $region26: #{_fused_forward.1} parent=0 // pred_check
    _
  $region27: #{_fused_forward.1} parent=0 // pred_check_branch
    %565 = sbr.rel (0) target = $region29
  $region28: #{_fused_forward.1} parent=0 // pred_region
    _
  $region29: #{_fused_forward.1} parent=0 // pred_fallthru
    _
  // Predicated region
  $region30: #{_fused_forward.1} parent=0 // pred_check
    _
  $region31: #{_fused_forward.1} parent=0 // pred_check_branch
    %567 = sbr.rel (0) target = $region33
  $region32: #{_fused_forward.1} parent=0 // pred_region
    _
  $region33: #{_fused_forward.1} parent=0 // pred_fallthru
    _

</llo_original>
